<compile_context>
chip_gen: v6e
topology: v6e:2x2x1
jax: 0.10.0
libtpu: 0.0.40
codegen_flags: <defaults>
</compile_context>

<pallas_src>
import jax
import jax.numpy as jnp
from jax.experimental import pallas as pl
from jax.experimental.pallas import tpu as pltpu

_MXU_DTYPE = jnp.bfloat16  # MXU operand dtype; accumulation is always f32.


def _round_up(x, m):
    return ((x + m - 1) // m) * m


def _pick_tiles(n):
    """Returns (n_pad, tn, tk): padded node count, row tile, contraction tile."""
    n8 = _round_up(max(n, 1), 8)
    if n8 < 128:
        return n8, n8, n8               # single full-extent block
    n_pad = _round_up(n8, 128)
    for t in (512, 256, 128):           # biggest tile that divides n_pad
        if n_pad % t == 0:
            return n_pad, t, t
    return n_pad, 128, 128


def _vmem_limit_bytes(tn, tk, c_in_p, c_out_p):
    c_big = max(c_in_p, c_out_p)
    need = (2 * tn * tk * 2            # A tile, double-buffered, bf16
            + 2 * tk * c_big * 2       # X / XW tile, double-buffered, bf16
            + 2 * c_in_p * c_out_p * 4  # W^T (grid-invariant) + headroom
            + 2 * c_out_p * 4          # bias
            + 2 * tn * c_out_p * 4     # output tile, double-buffered, f32
            + tn * c_big * 4)          # accumulator scratch
    return int(min(max(2 * need, 32 * 1024 * 1024), 64 * 1024 * 1024))


# ------------------------------ Pallas kernels -------------------------------
def _gcn_reassoc_kernel(a_ref, x_ref, wt_ref, b_ref, o_ref, acc_ref):
    """acc += A_tile @ X_tile; at k==last: out = relu(acc @ W^T + b).
    Used when C_in <= C_out (dominant NxN contraction runs against C_in)."""
    k = pl.program_id(1)

    @pl.when(k == 0)
    def _():
        acc_ref[...] = jnp.zeros_like(acc_ref)

    acc_ref[...] += jnp.dot(a_ref[...], x_ref[...],
                            preferred_element_type=jnp.float32)

    @pl.when(k == pl.num_programs(1) - 1)
    def _():
        out = jnp.dot(acc_ref[...], wt_ref[...],
                      preferred_element_type=jnp.float32)
        o_ref[...] = jnp.maximum(out + b_ref[...], 0.0)


def _xw_kernel(x_ref, wt_ref, o_ref):
    """Row-tiled pre-pass: XW_tile = X_tile @ W^T (bf16 out, f32 accumulate)."""
    o_ref[...] = jnp.dot(x_ref[...], wt_ref[...],
                         preferred_element_type=jnp.float32).astype(o_ref.dtype)


def _gcn_agg_kernel(a_ref, xw_ref, b_ref, o_ref, acc_ref):
    """acc += A_tile @ XW_tile; at k==last: out = relu(acc + b).
    Used when C_in > C_out."""
    k = pl.program_id(1)

    @pl.when(k == 0)
    def _():
        acc_ref[...] = jnp.zeros_like(acc_ref)

    acc_ref[...] += jnp.dot(a_ref[...], xw_ref[...],
                            preferred_element_type=jnp.float32)

    @pl.when(k == pl.num_programs(1) - 1)
    def _():
        o_ref[...] = jnp.maximum(acc_ref[...] + b_ref[...], 0.0)


# ------------------------ plain-JAX glue (gcn_norm) ---------------------------
def build_normalized_adjacency(edge_index, edge_weight, num_nodes,
                               padded_nodes, out_dtype):
    """gcn_norm (add_remaining_self_loops + D^-1/2 A D^-1/2) as a dense
    [target, source] matrix, built directly at its padded size/dtype."""
    row = edge_index[0]
    col = edge_index[1]
    ew = edge_weight.astype(jnp.float32)

    # add_remaining_self_loops(fill_value=1.0): non-self-loop edges kept;
    # existing self-loop edges folded into the per-node loop weight.
    non_loop = row != col
    ew_masked = jnp.where(non_loop, ew, 0.0)
    loop_w = jnp.ones((num_nodes,), jnp.float32)
    self_idx = jnp.where(non_loop, num_nodes, row)      # OOB index -> dropped
    loop_w = loop_w.at[self_idx].set(ew, mode="drop")

    ar = jnp.arange(num_nodes, dtype=row.dtype)
    all_row = jnp.concatenate([row, ar])
    all_col = jnp.concatenate([col, ar])
    all_w = jnp.concatenate([ew_masked, loop_w])

    deg = jnp.zeros((num_nodes,), jnp.float32).at[all_col].add(all_w)
    dinv = jnp.where(deg > 0, jax.lax.rsqrt(deg), 0.0)
    norm = dinv[all_row] * all_w * dinv[all_col]

    # A_hat[target, source] so the aggregation is A_hat @ x'.
    a = jnp.zeros((padded_nodes, padded_nodes), jnp.float32).at[
        all_col, all_row].add(norm)
    return a.astype(out_dtype)


# -------------------------------- forward ------------------------------------
def _gcn_forward(x, edge_index, edge_weight, w_t, bias):
    n = x.shape[0]
    c_in, c_out = w_t.shape

    n_pad, tn, tk = _pick_tiles(n)
    c_in_p = _round_up(c_in, 128)
    c_out_p = _round_up(c_out, 128)

    # Dense normalized adjacency, built directly at padded size in bf16
    # (no separate pad/cast pass over the dominant O(N^2) array).
    # TODO(synk): a sparse CSR path with scalar-prefetched row pointers would
    # skip the O(N^2) densification entirely at large N.
    a_p = build_normalized_adjacency(edge_index, edge_weight, n, n_pad,
                                     _MXU_DTYPE)

    x_p = jnp.zeros((n_pad, c_in_p), _MXU_DTYPE).at[:n, :c_in].set(
        x.astype(_MXU_DTYPE))
    wt_p = jnp.zeros((c_in_p, c_out_p), jnp.float32).at[:c_in, :c_out].set(
        w_t.astype(jnp.float32))
    b_p = jnp.zeros((1, c_out_p), jnp.float32).at[:, :c_out].set(
        bias.reshape(1, -1).astype(jnp.float32))

    grid = (n_pad // tn, n_pad // tk)
    comp = pltpu.CompilerParams(
        dimension_semantics=("parallel", "arbitrary"),
        vmem_limit_bytes=_vmem_limit_bytes(tn, tk, c_in_p, c_out_p),
    )
    cost = pl.CostEstimate(
        flops=2 * n_pad * n_pad * min(c_in_p, c_out_p)
              + 2 * n_pad * c_in_p * c_out_p,
        transcendentals=0,
        bytes_accessed=n_pad * n_pad * 2
                       + n_pad * (c_in_p + c_out_p) * 2
                       + n_pad * c_out_p * 4,
    )

    if c_in <= c_out:
        # (A @ X) @ W^T : the NxN contraction runs against the smaller channel.
        out_p = pl.pallas_call(
            _gcn_reassoc_kernel,
            out_shape=jax.ShapeDtypeStruct((n_pad, c_out_p), jnp.float32),
            grid=grid,
            in_specs=[
                pl.BlockSpec((tn, tk), lambda i, k: (i, k)),
                pl.BlockSpec((tk, c_in_p), lambda i, k: (k, 0)),
                pl.BlockSpec((c_in_p, c_out_p), lambda i, k: (0, 0)),
                pl.BlockSpec((1, c_out_p), lambda i, k: (0, 0)),
            ],
            out_specs=pl.BlockSpec((tn, c_out_p), lambda i, k: (i, 0)),
            scratch_shapes=[pltpu.VMEM((tn, c_in_p), jnp.float32)],
            compiler_params=comp,
            cost_estimate=cost,
        )(a_p, x_p, wt_p, b_p)
    else:
        # XW = X @ W^T once (row-tiled, bf16 output), then K-tiled A @ XW.
        xw = pl.pallas_call(
            _xw_kernel,
            out_shape=jax.ShapeDtypeStruct((n_pad, c_out_p), _MXU_DTYPE),
            grid=(n_pad // tn,),
            in_specs=[
                pl.BlockSpec((tn, c_in_p), lambda i: (i, 0)),
                pl.BlockSpec((c_in_p, c_out_p), lambda i: (0, 0)),
            ],
            out_specs=pl.BlockSpec((tn, c_out_p), lambda i: (i, 0)),
            compiler_params=pltpu.CompilerParams(
                dimension_semantics=("parallel",)),
        )(x_p, wt_p.astype(_MXU_DTYPE))
        out_p = pl.pallas_call(
            _gcn_agg_kernel,
            out_shape=jax.ShapeDtypeStruct((n_pad, c_out_p), jnp.float32),
            grid=grid,
            in_specs=[
                pl.BlockSpec((tn, tk), lambda i, k: (i, k)),
                pl.BlockSpec((tk, c_out_p), lambda i, k: (k, 0)),
                pl.BlockSpec((1, c_out_p), lambda i, k: (0, 0)),
            ],
            out_specs=pl.BlockSpec((tn, c_out_p), lambda i, k: (i, 0)),
            scratch_shapes=[pltpu.VMEM((tn, c_out_p), jnp.float32)],
            compiler_params=comp,
            cost_estimate=cost,
        )(a_p, xw, b_p)

    # Padded rows (>= n) hold relu(bias); sliced off here.
    return out_p[:n, :c_out]


_gcn_forward_jit = jax.jit(_gcn_forward)


# --------------------------------- module -------------------------------------
class DirectionalGraphConvolutionPallas:
    def __init__(self, in_channels, out_channels, key):
        kw, _ = jax.random.split(key)
        # GCNConv.lin.weight is (out, in); store W^T = (in, out). Glorot init.
        glorot = (6.0 / (in_channels + out_channels)) ** 0.5
        self.w_t = jax.random.uniform(
            kw, (in_channels, out_channels), jnp.float32, -glorot, glorot)
        self.bias = jnp.zeros((out_channels,), jnp.float32)

    def __call__(self, x, edge_index, edge_weight):
        return _gcn_forward_jit(x, edge_index, edge_weight, self.w_t, self.bias)


# -------------------------------- reference ------------------------------------
def reference(x, edge_index, edge_weight, w_t, bias):
    n = x.shape[0]
    a_hat = build_normalized_adjacency(edge_index, edge_weight, n, n,
                                       jnp.float32)
    return jnp.maximum(a_hat @ (x.astype(jnp.float32) @ w_t)
                       + bias.reshape(1, -1), 0.0)


def _run_case(key, n, c_in, c_out, e):
    k_x, k_src, k_dst, k_w, k_param = jax.random.split(key, 5)
    x = jax.random.normal(k_x, (n, c_in), jnp.float32)
    src = jax.random.randint(k_src, (e,), 0, n, jnp.int32)
    dst = jax.random.randint(k_dst, (e,), 0, n, jnp.int32)
    edge_index = jnp.stack([src, dst], axis=0)
    edge_weight = jax.random.uniform(k_w, (e,), jnp.float32, 0.1, 1.0)

    mod = DirectionalGraphConvolutionPallas(c_in, c_out, k_param)

    out = jax.block_until_ready(mod(x, edge_index, edge_weight))
    ref = jax.block_until_ready(
        reference(x, edge_index, edge_weight, mod.w_t, mod.bias))

    assert out.shape == (n, c_out)
    assert out.dtype == jnp.float32
    # bf16 MXU operands + f32 accumulation vs a pure-f32 reference.
    err = float(jnp.max(jnp.abs(out - ref)))
    assert jnp.allclose(out, ref, atol=2e-2, rtol=2e-2), err


if __name__ == "__main__":
    key = jax.random.PRNGKey(0)
    k1, k2 = jax.random.split(key)
    _run_case(k1, n=16, c_in=8, c_out=32, e=40)   # reassoc path (C_in <= C_out)
    _run_case(k2, n=24, c_in=32, c_out=8, e=60)   # agg path (C_in > C_out)
    print("KERNEL_OK")
</pallas_src>

<mosaic_0001>
module attributes {stable_mosaic.version = 11 : i64} {
  func.func private @main(%arg0: i32) attributes {dimension_semantics = [#tpu.dimension_semantics<core_parallel>], iteration_bounds = array<i64: 2>, tpu.core_type = #tpu.core_type<sc_scalar_subcore>, window_params = []} {
    return
  }
}

module attributes {stable_mosaic.version = 11 : i64} {
  func.func private @main(%arg0: i32) attributes {dimension_semantics = [#tpu.dimension_semantics<core_parallel>], iteration_bounds = array<i64: 2>, tpu.core_type = #tpu.core_type<sc_scalar_subcore>, window_params = []} {
    return
  }
}

module attributes {stable_mosaic.version = 11 : i64} {
  func.func @_gcn_reassoc_kernel(%arg0: i32, %arg1: i32, %arg2: memref<16x16xbf16, #tpu.memory_space<vmem>>, %arg3: memref<16x128xbf16, #tpu.memory_space<vmem>>, %arg4: memref<128x128xf32, #tpu.memory_space<vmem>>, %arg5: memref<1x128xf32, #tpu.memory_space<vmem>>, %arg6: memref<16x128xf32, #tpu.memory_space<vmem>>, %arg7: memref<16x128xf32, #tpu.memory_space<vmem>>) attributes {dimension_semantics = [#tpu.dimension_semantics<parallel>, #tpu.dimension_semantics<arbitrary>], iteration_bounds = array<i64: 1, 1>, scalar_prefetch = 0 : i64, scratch_operands = 1 : i64, tpu.core_type = #tpu.core_type<tc>, window_params = [{transform_indices = @transform_0, window_bounds = array<i64: 16, 16>}, {transform_indices = @transform_1, window_bounds = array<i64: 16, 128>}, {pipeline_mode = #tpu.pipeline_mode<synchronous>, transform_indices = @transform_2, window_bounds = array<i64: 128, 128>}, {pipeline_mode = #tpu.pipeline_mode<synchronous>, transform_indices = @transform_3, window_bounds = array<i64: 1, 128>}, {transform_indices = @transform_4, window_bounds = array<i64: 16, 128>}]} {
    %c0_i32 = arith.constant 0 : i32
    %0 = arith.cmpi eq, %arg1, %c0_i32 : i32
    %1 = arith.extui %0 : i1 to i32
    %c0_i32_0 = arith.constant 0 : i32
    %2 = arith.cmpi ne, %1, %c0_i32_0 : i32
    scf.if %2 {
      %cst_10 = arith.constant 0.000000e+00 : f32
      %12 = vector.broadcast %cst_10 : f32 to vector<16x128xf32>
      %c0_11 = arith.constant 0 : index
      %c0_12 = arith.constant 0 : index
      %13 = vector.load %arg7[%c0_11, %c0_12] : memref<16x128xf32, #tpu.memory_space<vmem>>, vector<16x128xf32>
      tpu.vector_store %arg7[%c0_11, %c0_12], %12 {strides = array<i32>} : memref<16x128xf32, #tpu.memory_space<vmem>>, vector<16x128xf32>,
    } else {
    }
    %c0 = arith.constant 0 : index
    %c0_1 = arith.constant 0 : index
    %3 = vector.load %arg7[%c0, %c0_1] : memref<16x128xf32, #tpu.memory_space<vmem>>, vector<16x128xf32>
    %c0_2 = arith.constant 0 : index
    %c0_3 = arith.constant 0 : index
    %4 = vector.load %arg2[%c0_2, %c0_3] : memref<16x16xbf16, #tpu.memory_space<vmem>>, vector<16x16xbf16>
    %c0_4 = arith.constant 0 : index
    %c0_5 = arith.constant 0 : index
    %5 = vector.load %arg3[%c0_4, %c0_5] : memref<16x128xbf16, #tpu.memory_space<vmem>>, vector<16x128xbf16>
    %cst = arith.constant dense<0.000000e+00> : vector<16x128xf32>
    %6 = tpu.matmul %4, %5, %cst {dimension_numbers = #tpu.dot_dimension_numbers<[1], [0], [0], [1], [0, 0, 1, 1], [], []>} : vector<16x16xbf16>, vector<16x128xbf16>, vector<16x128xf32> -> vector<16x128xf32>
    %7 = arith.addf %3, %6 : vector<16x128xf32>
    %c0_6 = arith.constant 0 : index
    %c0_7 = arith.constant 0 : index
    %8 = vector.load %arg7[%c0_6, %c0_7] : memref<16x128xf32, #tpu.memory_space<vmem>>, vector<16x128xf32>
    tpu.vector_store %arg7[%c0_6, %c0_7], %7 {strides = array<i32>} : memref<16x128xf32, #tpu.memory_space<vmem>>, vector<16x128xf32>,
    %c0_i32_8 = arith.constant 0 : i32
    %9 = arith.cmpi eq, %arg1, %c0_i32_8 : i32
    %10 = arith.extui %9 : i1 to i32
    %c0_i32_9 = arith.constant 0 : i32
    %11 = arith.cmpi ne, %10, %c0_i32_9 : i32
    scf.if %11 {
      %c0_10 = arith.constant 0 : index
      %c0_11 = arith.constant 0 : index
      %12 = vector.load %arg7[%c0_10, %c0_11] : memref<16x128xf32, #tpu.memory_space<vmem>>, vector<16x128xf32>
      %c0_12 = arith.constant 0 : index
      %c0_13 = arith.constant 0 : index
      %13 = vector.load %arg4[%c0_12, %c0_13] : memref<128x128xf32, #tpu.memory_space<vmem>>, vector<128x128xf32>
      %cst_14 = arith.constant dense<0.000000e+00> : vector<16x128xf32>
      %14 = tpu.matmul %12, %13, %cst_14 {dimension_numbers = #tpu.dot_dimension_numbers<[1], [0], [0], [1], [0, 0, 1, 1], [], []>} : vector<16x128xf32>, vector<128x128xf32>, vector<16x128xf32> -> vector<16x128xf32>
      %c0_15 = arith.constant 0 : index
      %c0_16 = arith.constant 0 : index
      %15 = vector.load %arg5[%c0_15, %c0_16] : memref<1x128xf32, #tpu.memory_space<vmem>>, vector<1x128xf32>
      %16 = vector.broadcast %15 : vector<1x128xf32> to vector<16x128xf32>
      %17 = arith.addf %14, %16 : vector<16x128xf32>
      %cst_17 = arith.constant 0.000000e+00 : f32
      %18 = vector.broadcast %cst_17 : f32 to vector<16x128xf32>
      %19 = arith.maximumf %17, %18 : vector<16x128xf32>
      %c0_18 = arith.constant 0 : index
      %c0_19 = arith.constant 0 : index
      %20 = vector.load %arg6[%c0_18, %c0_19] : memref<16x128xf32, #tpu.memory_space<vmem>>, vector<16x128xf32>
      tpu.vector_store %arg6[%c0_18, %c0_19], %19 {strides = array<i32>} : memref<16x128xf32, #tpu.memory_space<vmem>>, vector<16x128xf32>,
    } else {
    }
    return
  }
  func.func @transform_0(%arg0: i32, %arg1: i32) -> (i32, i32) {
    %c0_i32 = arith.constant 0 : i32
    return %arg0, %arg1 : i32, i32
  }
  func.func @transform_1(%arg0: i32, %arg1: i32) -> (i32, i32) {
    %c0_i32 = arith.constant 0 : i32
    %c0_i32_0 = arith.constant 0 : i32
    return %arg1, %c0_i32 : i32, i32
  }
  func.func @transform_2(%arg0: i32, %arg1: i32) -> (i32, i32) {
    %c0_i32 = arith.constant 0 : i32
    %c0_i32_0 = arith.constant 0 : i32
    %c0_i32_1 = arith.constant 0 : i32
    return %c0_i32, %c0_i32_0 : i32, i32
  }
  func.func @transform_3(%arg0: i32, %arg1: i32) -> (i32, i32) {
    %c0_i32 = arith.constant 0 : i32
    %c0_i32_0 = arith.constant 0 : i32
    %c0_i32_1 = arith.constant 0 : i32
    return %c0_i32, %c0_i32_0 : i32, i32
  }
  func.func @transform_4(%arg0: i32, %arg1: i32) -> (i32, i32) {
    %c0_i32 = arith.constant 0 : i32
    %c0_i32_0 = arith.constant 0 : i32
    return %arg0, %c0_i32 : i32, i32
  }
}

</mosaic_0001>

<llo_original>
// kernel: _gcn_forward.1
$region0: #{_gcn_forward.1}
  #allocation0 [shape = 'u32[]', space=smem, size = 0x4, offset = 0x4, fixed_abs, tag = 'smem constant byte address 0x4 - core index']
  #allocation1 [shape = 'u32[144,128]{1,0:T(1,128)}', space=vmem, size = 0x12000, scoped, tag = 'internal scratch']
  #allocation2 [shape = 'f32[16,128]{1,0:T(8,128)}', space=vmem, size = 0x2000, scoped, tag = 'scratch operand']
  %s0 = inlined_call_operand.vmem [shape: bf16[16,16], index: 0, kind: input, shape index: {}]
  %s1 = inlined_call_operand.vmem [shape: bf16[16,128], index: 1, kind: input, shape index: {}]
  %s2 = inlined_call_operand.vmem [shape: f32[128,128], index: 2, kind: input, shape index: {}]
  %s3 = inlined_call_operand.vmem [shape: f32[1,128], index: 3, kind: input, shape index: {}]
  %s4 = inlined_call_operand.hbm [shape: f32[16,128], index: 4, kind: output, shape index: {}]
  %s5 = sld [smem:[#allocation0]]
  $region34: #{_gcn_forward.1} parent=0
    _
  %s7 = ssub.s32 1, %s5
  %s8 = scalar_select 0, %s7, %s5
  $region1: #{_gcn_forward.1} parent=0
    #allocation3 [shape = 'u8[8192]{0}', space=vmem, size = 0x2000, scoped, tag = 'output window, operand 0, single buffered']
    #allocation4 [shape = 's32[1]{0}', space=sflag, size = 0x4, scoped, tag = 'scoped memory for _gcn_forward.1']
    %9 = vsyncpa [#allocation4], 0
    // Predicated region
    $region2: #{_gcn_forward.1} parent=1 // pred_check
      _
    $region3: #{_gcn_forward.1} parent=1 // pred_check_branch
      %11 = sbr.rel (0) target = $region5
    $region4: #{_gcn_forward.1} parent=1 // pred_region
      _
    $region5: #{_gcn_forward.1} parent=1 // pred_fallthru
      _
    // Predicated region
    $region6: #{_gcn_forward.1} parent=1 // pred_check
      _
    $region7: #{_gcn_forward.1} parent=1 // pred_check_branch
      %13 = sbr.rel (0) target = $region9
    $region8: #{_gcn_forward.1} parent=1 // pred_region
      _
    $region9: #{_gcn_forward.1} parent=1 // pred_fallthru
      _
    // Predicated region
    $region10: #{_gcn_forward.1} parent=1 // pred_check
      _
    $region11: #{_gcn_forward.1} parent=1 // pred_check_branch
      %15 = sbr.rel (0) target = $region13
    $region12: #{_gcn_forward.1} parent=1 // pred_region
      _
    $region13: #{_gcn_forward.1} parent=1 // pred_fallthru
      _
    // Predicated region
    $region14: #{_gcn_forward.1} parent=1 // pred_check
      _
    $region15: #{_gcn_forward.1} parent=1 // pred_check_branch
      %17 = sbr.rel (0) target = $region17
    $region16: #{_gcn_forward.1} parent=1 // pred_region
      _
    $region17: #{_gcn_forward.1} parent=1 // pred_fallthru
      _
    %p19 = scmp.eq.s32.totalorder 0, 0
    // Predicated region
    $region18: #{_gcn_forward.1} parent=1 // pred_check
      %p20 = pneg %p19
    $region19: #{_gcn_forward.1} parent=1 // pred_check_branch
      %22 = sbr.rel (%p20) target = $region21
    $region20: #{_gcn_forward.1} parent=1 // pred_region
      %23 = vst [vmem:[#allocation2] sm:$0xff] 0.0
      %24 = vst [vmem:[#allocation2 + $0x8] sm:$0xff] 0.0
    $region21: #{_gcn_forward.1} parent=1 // pred_fallthru
      _
    %v25 = vld [vmem:[#allocation2] sm:$0xff]
    %v26 = vld [vmem:[#allocation2 + $0x8] sm:$0xff]
    %v27 = vld [vmem:[%s0] sm:$0xf]
    %v28 = vld [vmem:[%s0 + $0x4] sm:$0xf]
    %v29 = vld [vmem:[%s1] sm:$0xf]
    %v30 = vld [vmem:[%s1 + $0x4] sm:$0xf]
    %v33 = vunpack.c.l.b16 %v27
    %v34 = vunpack.c.l.b16 %v28
    %v35 = vpack.c.b16 %v34, %v33
    %v38 = vunpack.c.l.b16 %v29
    %v39 = vunpack.c.l.b16 %v30
    %v40 = vpack.c.b16 %v39, %v38
    %vm42 = vcmask 130048
    %v44 = vsel %vm42, %v35, 0
    %46 = vmatprep.subr.bf16.mxu0 0
    %47 = vmatpush1.bf16.msra.mxu0 0
    %48 = vmatprep.subr.bf16.mxu0 0
    %49 = vmatpush1.bf16.msra.mxu0 0
    %50 = vmatprep.subr.bf16.mxu0 0
    %51 = vmatpush1.bf16.msra.mxu0 0
    %52 = vmatprep.subr.bf16.mxu0 0
    %53 = vmatpush1.bf16.msra.mxu0 0
    %54 = vmatprep.subr.bf16.mxu0 0
    %55 = vmatpush1.bf16.msra.mxu0 0
    %56 = vmatprep.subr.bf16.mxu0 0
    %57 = vmatpush1.bf16.msra.mxu0 0
    %58 = vmatprep.subr.bf16.mxu0 0
    %59 = vmatpush1.bf16.msra.mxu0 0
    %60 = vmatprep.subr.bf16.mxu0 0
    %61 = vmatpush1.bf16.msra.mxu0 %v40
    %62 = vmatprep.subr.bf16.mxu0 0
    %63 = vmatpush2.bf16.msra.mxu0 0
    %64 = vmatprep.subr.bf16.mxu0 0
    %65 = vmatpush2.bf16.msra.mxu0 0
    %66 = vmatprep.subr.bf16.mxu0 0
    %67 = vmatpush2.bf16.msra.mxu0 0
    %68 = vmatprep.subr.bf16.mxu0 0
    %69 = vmatpush2.bf16.msra.mxu0 0
    %70 = vmatprep.subr.bf16.mxu0 0
    %71 = vmatpush2.bf16.msra.mxu0 0
    %72 = vmatprep.subr.bf16.mxu0 0
    %73 = vmatpush2.bf16.msra.mxu0 0
    %74 = vmatprep.subr.bf16.mxu0 0
    %75 = vmatpush2.bf16.msra.mxu0 0
    %76 = vmatprep.subr.bf16.mxu0 0
    %77 = vmatpush2.bf16.msra.mxu0 0
    %78 = vmatprep.mubr.bf16.mxu0 0
    %79 = vmatmul.mubr.bf16.gmra.mxu0 %v44
    %v80 = vpop.f32.mrf.mxu0
    %v81 = vadd.f32 0.0, %v80
    %v82 = vpop.f32.mrf.mxu0
    %v83 = vpop.f32.mrf.mxu0
    %v84 = vadd.f32 0.0, %v83
    %v85 = vpop.f32.mrf.mxu0
    %86 = vdwg.mxu0
    %v87 = vadd.f32 %v25, %v81
    %v88 = vadd.f32 %v26, %v84
    %89 = vst [vmem:[#allocation2] sm:$0xff] %v87
    %90 = vst [vmem:[#allocation2 + $0x8] sm:$0xff] %v88
    // Predicated region
    $region22: #{_gcn_forward.1} parent=1 // pred_check
      %p91 = pneg %p19
    $region23: #{_gcn_forward.1} parent=1 // pred_check_branch
      %93 = sbr.rel (%p91) target = $region25
    $region24: #{_gcn_forward.1} parent=1 // pred_region
      %v94 = vld [vmem:[#allocation2] sm:$0xff]
      %v95 = vld [vmem:[#allocation2 + $0x8] sm:$0xff]
      %v96 = vld [vmem:[%s2] sm:$0xff]
      %v97 = vld [vmem:[%s2 + $0x8] sm:$0xff]
      %v98 = vld [vmem:[%s2 + $0x10] sm:$0xff]
      %v99 = vld [vmem:[%s2 + $0x18] sm:$0xff]
      %v100 = vld [vmem:[%s2 + $0x20] sm:$0xff]
      %v101 = vld [vmem:[%s2 + $0x28] sm:$0xff]
      %v102 = vld [vmem:[%s2 + $0x30] sm:$0xff]
      %v103 = vld [vmem:[%s2 + $0x38] sm:$0xff]
      %v104 = vld [vmem:[%s2 + $0x40] sm:$0xff]
      %v105 = vld [vmem:[%s2 + $0x48] sm:$0xff]
      %v106 = vld [vmem:[%s2 + $0x50] sm:$0xff]
      %v107 = vld [vmem:[%s2 + $0x58] sm:$0xff]
      %v108 = vld [vmem:[%s2 + $0x60] sm:$0xff]
      %v109 = vld [vmem:[%s2 + $0x68] sm:$0xff]
      %v110 = vld [vmem:[%s2 + $0x70] sm:$0xff]
      %v111 = vld [vmem:[%s2 + $0x78] sm:$0xff]
      %v112 = vld [vmem:[%s3] sm:$0x1]
      %v114 = vlaneseq
      %v115 = vshrl.u32 %v114, 7
      %v116 = vsub.s32 0, %v115
      %v117 = vrot.slane %v112, %v116
      %119 = vmatprep.subr.mxu0 0.0
      %120 = vmatpush1.msra.mxu0 %v111
      %121 = vmatprep.subr.mxu0 0.0
      %122 = vmatpush1.msra.mxu0 %v110
      %123 = vmatprep.subr.mxu0 0.0
      %124 = vmatpush1.msra.mxu0 %v109
      %125 = vmatprep.subr.mxu0 0.0
      %126 = vmatpush1.msra.mxu0 %v108
      %127 = vmatprep.subr.mxu0 0.0
      %128 = vmatpush1.msra.mxu0 %v107
      %129 = vmatprep.subr.mxu0 0.0
      %130 = vmatpush1.msra.mxu0 %v106
      %131 = vmatprep.subr.mxu0 0.0
      %132 = vmatpush1.msra.mxu0 %v105
      %133 = vmatprep.subr.mxu0 0.0
      %134 = vmatpush1.msra.mxu0 %v104
      %135 = vmatprep.subr.mxu0 0.0
      %136 = vmatpush1.msra.mxu0 %v103
      %137 = vmatprep.subr.mxu0 0.0
      %138 = vmatpush1.msra.mxu0 %v102
      %139 = vmatprep.subr.mxu0 0.0
      %140 = vmatpush1.msra.mxu0 %v101
      %141 = vmatprep.subr.mxu0 0.0
      %142 = vmatpush1.msra.mxu0 %v100
      %143 = vmatprep.subr.mxu0 0.0
      %144 = vmatpush1.msra.mxu0 %v99
      %145 = vmatprep.subr.mxu0 0.0
      %146 = vmatpush1.msra.mxu0 %v98
      %147 = vmatprep.subr.mxu0 0.0
      %148 = vmatpush1.msra.mxu0 %v97
      %149 = vmatprep.subr.mxu0 0.0
      %150 = vmatpush1.msra.mxu0 %v96
      %151 = vmatprep.subr.mxu0 0.0
      %152 = vmatpush2.msra.mxu0 0.0
      %153 = vmatprep.subr.mxu0 0.0
      %154 = vmatpush2.msra.mxu0 0.0
      %155 = vmatprep.subr.mxu0 0.0
      %156 = vmatpush2.msra.mxu0 0.0
      %157 = vmatprep.subr.mxu0 0.0
      %158 = vmatpush2.msra.mxu0 0.0
      %159 = vmatprep.subr.mxu0 0.0
      %160 = vmatpush2.msra.mxu0 0.0
      %161 = vmatprep.subr.mxu0 0.0
      %162 = vmatpush2.msra.mxu0 0.0
      %163 = vmatprep.subr.mxu0 0.0
      %164 = vmatpush2.msra.mxu0 0.0
      %165 = vmatprep.subr.mxu0 0.0
      %166 = vmatpush2.msra.mxu0 0.0
      %167 = vmatprep.subr.mxu0 0.0
      %168 = vmatpush2.msra.mxu0 0.0
      %169 = vmatprep.subr.mxu0 0.0
      %170 = vmatpush2.msra.mxu0 0.0
      %171 = vmatprep.subr.mxu0 0.0
      %172 = vmatpush2.msra.mxu0 0.0
      %173 = vmatprep.subr.mxu0 0.0
      %174 = vmatpush2.msra.mxu0 0.0
      %175 = vmatprep.subr.mxu0 0.0
      %176 = vmatpush2.msra.mxu0 0.0
      %177 = vmatprep.subr.mxu0 0.0
      %178 = vmatpush2.msra.mxu0 0.0
      %179 = vmatprep.subr.mxu0 0.0
      %180 = vmatpush2.msra.mxu0 0.0
      %181 = vmatprep.subr.mxu0 0.0
      %182 = vmatpush2.msra.mxu0 0.0
      %183 = vmatprep.mubr.f32.mxu0 0.0
      %184 = vmatmul.mubr.f32.gmra.mxu0 %v94
      %v185 = vpop.f32.mrf.mxu0
      %v186 = vadd.f32 %v117, %v185
      %v187 = vpop.f32.mrf.mxu0
      %188 = vmatprep.mubr.f32.mxu0 0.0
      %189 = vmatmul.mubr.f32.gmra.mxu0 %v95
      %v190 = vpop.f32.mrf.mxu0
      %v191 = vadd.f32 %v117, %v190
      %v192 = vpop.f32.mrf.mxu0
      %193 = vdwg.mxu0
      %v194 = vmax.f32 %v186, 0.0
      %v195 = vmax.f32 %v191, 0.0
      %196 = vst [vmem:[#allocation3] sm:$0xff] %v194
      %197 = vst [vmem:[#allocation3 + $0x8] sm:$0xff] %v195
    $region25: #{_gcn_forward.1} parent=1 // pred_fallthru
      _
    // Predicated region
    $region26: #{_gcn_forward.1} parent=1 // pred_check
      _
    $region27: #{_gcn_forward.1} parent=1 // pred_check_branch
      %199 = sbr.rel (0) target = $region29
    $region28: #{_gcn_forward.1} parent=1 // pred_region
      %s201 = ssub.s32 256, 256
      %202 = vsyncadd [#allocation4], %s201
      %s203 = sshll.u32 [#allocation3], 4
      %s204 = int_to_ptr.vmem [resolvable:$true] %s203
      %209 = dma.vmem_to_hbm [thread:$0]  %s204, 256, %s4, [#allocation4], 128, 128, 8
    $region29: #{_gcn_forward.1} parent=1 // pred_fallthru
      _
    // Predicated region
    $region30: #{_gcn_forward.1} parent=1 // pred_check
      _
    $region31: #{_gcn_forward.1} parent=1 // pred_check_branch
      %211 = sbr.rel (0) target = $region33
    $region32: #{_gcn_forward.1} parent=1 // pred_region
      %212 = dma.done [#allocation4], 256
    $region33: #{_gcn_forward.1} parent=1 // pred_fallthru
      _
    %213 = vsyncpa [#allocation4], 1

</llo_original>
